<compile_context>
chip_gen: v6e
topology: v6e:2x2x1
jax: 0.10.0
libtpu: 0.0.40
codegen_flags: <defaults>
</compile_context>

<pallas_src>
import functools

import jax
import jax.numpy as jnp
from jax.experimental import pallas as pl
from jax.experimental.pallas import tpu as pltpu


_MAX_SPATIAL_TILE = 4096   # lanes per spatial tile on the multi-tile path (128-multiple)
_ROW_TILE_CAP = 32768      # absolute cap on the row tile (sublane extent)


# --------------------------------------------------------------------------- #
# Kernels
# --------------------------------------------------------------------------- #
def _concat_pool_single_tile_kernel(x_ref, max_ref, avg_ref, *, inv_hw):
    """H*W fits in one tile: reduce the whole row in one shot (no accumulators)."""
    x = x_ref[...]
    # Max in the input's native dtype; sum widens to f32 inside the reduction.
    max_ref[...] = jnp.max(x, axis=-1, keepdims=True).astype(max_ref.dtype)
    s = jnp.sum(x, axis=-1, keepdims=True, dtype=jnp.float32)
    avg_ref[...] = (s * inv_hw).astype(avg_ref.dtype)


def _concat_pool_multi_tile_kernel(x_ref, max_ref, avg_ref, max_acc, sum_acc, *,
                                   hw, tkw, num_k):
    """H*W spans several spatial tiles: running max / sum in f32 VMEM scratch."""
    k = pl.program_id(1)

    @pl.when(k == 0)
    def _init():
        max_acc[...] = jnp.full(max_acc.shape, -jnp.inf, dtype=max_acc.dtype)
        sum_acc[...] = jnp.zeros(sum_acc.shape, dtype=sum_acc.dtype)

    def accumulate(masked):
        x = x_ref[...]
        if masked:
            # Ragged final spatial tile: lanes >= hw hold clipped/stale data.
            lane = jax.lax.broadcasted_iota(jnp.int32, x.shape, 1)
            valid = ((num_k - 1) * tkw + lane) < hw
            if jnp.issubdtype(x.dtype, jnp.floating):
                fill = jnp.asarray(jnp.finfo(x.dtype).min, dtype=x.dtype)
            else:
                fill = jnp.asarray(jnp.iinfo(x.dtype).min, dtype=x.dtype)
            x_max = jnp.where(valid, x, fill)
            x_sum = jnp.where(valid, x, jnp.zeros((), dtype=x.dtype))
        else:
            x_max = x
            x_sum = x
        # jnp.max / jnp.sum fold 128-lane partials in-register and emit a single
        # cross-lane (XLU) reduce per sublane group per step; the sum widens to
        # f32 inside the reduction (no full-width f32 tile copy).
        tile_max = jnp.max(x_max, axis=-1, keepdims=True).astype(jnp.float32)
        tile_sum = jnp.sum(x_sum, axis=-1, keepdims=True, dtype=jnp.float32)
        max_acc[...] = jnp.maximum(max_acc[...], tile_max)
        sum_acc[...] = sum_acc[...] + tile_sum

    if hw % tkw != 0:
        # Mask only the last spatial step; the hot loop stays mask-free.
        @pl.when(k < num_k - 1)
        def _body():
            accumulate(masked=False)

        @pl.when(k == num_k - 1)
        def _tail():
            accumulate(masked=True)
    else:
        accumulate(masked=False)

    @pl.when(k == num_k - 1)
    def _finalize():
        max_ref[...] = max_acc[...].astype(max_ref.dtype)
        avg_ref[...] = (sum_acc[...] * (1.0 / hw)).astype(avg_ref.dtype)


# --------------------------------------------------------------------------- #
# Tiling plan (generation-aware)
# --------------------------------------------------------------------------- #
def _vmem_capacity_bytes():
    """Physical VMEM per TensorCore; safe fallback if the query is unavailable."""
    try:
        return int(pltpu.get_tpu_info().vmem_capacity_bytes)
    except Exception:
        return 64 * 1024 * 1024   # v7x per-core VMEM; a safe lower bound everywhere


def _plan_tiles(rows, hw, itemsize):
    """Return (row_tile, spatial_tile, num_spatial_tiles, vmem_limit_bytes)."""
    if hw <= _MAX_SPATIAL_TILE:
        tkw, num_k = hw, 1                 # single spatial tile == full H*W dim
    else:
        tkw = _MAX_SPATIAL_TILE            # multiple of 128 lanes
        num_k = pl.cdiv(hw, tkw)

    lanes_padded = pl.cdiv(tkw, 128) * 128          # VMEM lane padding for small hw
    sub = max(8, 32 // max(int(itemsize), 1))       # 8 (32-bit) / 16 (bf16) / 32 (int8)

    # Per-row bytes of the full VMEM working set.
    per_row = 2 * lanes_padded * itemsize           # double-buffered input tile
    per_row += 2 * 2 * 128 * itemsize               # 2 outputs x 2 buffers, lane-padded
    if num_k > 1:
        per_row += 2 * 128 * 4                      # f32 running max / running sum

    vmem = _vmem_capacity_bytes()
    budget = (vmem * 7) // 10                       # leave headroom for compiler scratch
    tr = budget // per_row
    tr = max((tr // sub) * sub, sub)
    tr = min(tr, _ROW_TILE_CAP)
    tr = min(tr, pl.cdiv(rows, sub) * sub)
    if tr >= rows:
        tr = rows                                   # full-dim block (any row count legal)

    footprint = tr * per_row
    vmem_limit = min(footprint + max(8 * 1024 * 1024, vmem // 10), (vmem * 9) // 10)
    vmem_limit = max(int(vmem_limit), 16 * 1024 * 1024)
    return tr, tkw, num_k, vmem_limit


# --------------------------------------------------------------------------- #
# Public wrapper
# --------------------------------------------------------------------------- #
def adaptive_concat_pool2d(x, sz=None):
    """JAX/Pallas AdaptiveConcatPool2d: (N, C, H, W) -> (N, 2*C, 1, 1)."""
    out_size = sz or 1
    assert out_size == 1, "Only sz=1 / sz=None (global pooling) is implemented."

    N, C, H, W = x.shape
    rows, hw = N * C, H * W
    x2d = x.reshape(rows, hw)
    itemsize = jnp.dtype(x.dtype).itemsize

    tr, tkw, num_k, vmem_limit = _plan_tiles(rows, hw, itemsize)
    num_r = pl.cdiv(rows, tr)       # non-divisible row grid; no wrapper-side padding

    out_shape = (jax.ShapeDtypeStruct((rows, 1), x.dtype),
                 jax.ShapeDtypeStruct((rows, 1), x.dtype))

    if num_k == 1:
        kernel = functools.partial(_concat_pool_single_tile_kernel, inv_hw=1.0 / hw)
        grid_spec = pltpu.PrefetchScalarGridSpec(
            num_scalar_prefetch=0,
            grid=(num_r,),
            in_specs=[pl.BlockSpec((tr, tkw), lambda r: (r, 0))],
            out_specs=(pl.BlockSpec((tr, 1), lambda r: (r, 0)),
                       pl.BlockSpec((tr, 1), lambda r: (r, 0))),
        )
        dims = ("parallel",)
    else:
        kernel = functools.partial(_concat_pool_multi_tile_kernel,
                                   hw=hw, tkw=tkw, num_k=num_k)
        grid_spec = pltpu.PrefetchScalarGridSpec(
            num_scalar_prefetch=0,
            grid=(num_r, num_k),
            in_specs=[pl.BlockSpec((tr, tkw), lambda r, k: (r, k))],
            out_specs=(pl.BlockSpec((tr, 1), lambda r, k: (r, 0)),
                       pl.BlockSpec((tr, 1), lambda r, k: (r, 0))),
            scratch_shapes=[pltpu.VMEM((tr, 1), jnp.float32),   # running max
                            pltpu.VMEM((tr, 1), jnp.float32)],  # running sum
        )
        # Row tiles are independent ("parallel" -> megacore-shardable on v7x's
        # two TensorCores); the spatial reduction axis is last and "arbitrary".
        dims = ("parallel", "arbitrary")

    max_out, avg_out = pl.pallas_call(
        kernel,
        out_shape=out_shape,
        grid_spec=grid_spec,
        compiler_params=pltpu.CompilerParams(
            dimension_semantics=dims,
            vmem_limit_bytes=vmem_limit,
        ),
    )(x2d)

    max_out = max_out.reshape(N, C, 1, 1)
    avg_out = avg_out.reshape(N, C, 1, 1)
    # torch.cat([mp(x), ap(x)], dim=1): max channels first, then avg channels.
    return jnp.concatenate([max_out, avg_out], axis=1)


# --------------------------------------------------------------------------- #
# Demo / self-check
# --------------------------------------------------------------------------- #
if __name__ == "__main__":
    # Primary example (single-spatial-tile fast path).
    key = jax.random.PRNGKey(0)
    N, C, H, W = 2, 4, 16, 16
    x = jax.random.normal(key, (N, C, H, W), dtype=jnp.float32)

    out = jax.block_until_ready(adaptive_concat_pool2d(x, sz=None))

    ref = jnp.concatenate(
        [jnp.max(x, axis=(2, 3), keepdims=True),
         jnp.mean(x, axis=(2, 3), keepdims=True)], axis=1)
    assert out.shape == (N, 2 * C, 1, 1), out.shape
    assert jnp.allclose(out, ref, atol=1e-5, rtol=1e-5), "mismatch (single-tile path)"

    # Secondary check: exercises the multi-spatial-tile path (H*W > 4096 with a
    # ragged tail) and a row count that is not a sublane multiple.
    key2 = jax.random.PRNGKey(1)
    N2, C2, H2, W2 = 1, 3, 72, 72
    x2 = jax.random.normal(key2, (N2, C2, H2, W2), dtype=jnp.float32)
    out2 = jax.block_until_ready(adaptive_concat_pool2d(x2))
    ref2 = jnp.concatenate(
        [jnp.max(x2, axis=(2, 3), keepdims=True),
         jnp.mean(x2, axis=(2, 3), keepdims=True)], axis=1)
    assert out2.shape == (N2, 2 * C2, 1, 1), out2.shape
    assert jnp.allclose(out2, ref2, atol=1e-5, rtol=1e-5), "mismatch (multi-tile path)"

    print("KERNEL_OK")
</pallas_src>

<mosaic_0001>
module attributes {stable_mosaic.version = 11 : i64} {
  func.func @_concat_pool_single_tile_kernel(%arg0: i32, %arg1: memref<8x256xf32, #tpu.memory_space<vmem>>, %arg2: memref<8x1xf32, #tpu.memory_space<vmem>>, %arg3: memref<8x1xf32, #tpu.memory_space<vmem>>) attributes {dimension_semantics = [#tpu.dimension_semantics<parallel>], iteration_bounds = array<i64: 1>, scalar_prefetch = 0 : i64, scratch_operands = 0 : i64, tpu.core_type = #tpu.core_type<tc>, window_params = [{transform_indices = @transform_0, window_bounds = array<i64: 8, 256>}, {transform_indices = @transform_1, window_bounds = array<i64: 8, 1>}, {transform_indices = @transform_2, window_bounds = array<i64: 8, 1>}]} {
    %c0 = arith.constant 0 : index
    %c0_0 = arith.constant 0 : index
    %0 = vector.load %arg1[%c0, %c0_0] : memref<8x256xf32, #tpu.memory_space<vmem>>, vector<8x256xf32>
    %cst = arith.constant dense<0xFF800000> : vector<8xf32>
    %1 = vector.multi_reduction <maximumf>, %0, %cst [1] : vector<8x256xf32> to vector<8xf32>
    %2 = vector.shape_cast %1 : vector<8xf32> to vector<8x1xf32>
    %c0_1 = arith.constant 0 : index
    %c0_2 = arith.constant 0 : index
    %3 = vector.load %arg2[%c0_1, %c0_2] : memref<8x1xf32, #tpu.memory_space<vmem>>, vector<8x1xf32>
    tpu.vector_store %arg2[%c0_1, %c0_2], %2 {strides = array<i32>} : memref<8x1xf32, #tpu.memory_space<vmem>>, vector<8x1xf32>,
    %cst_3 = arith.constant dense<0.000000e+00> : vector<8xf32>
    %4 = vector.multi_reduction <add>, %0, %cst_3 [1] : vector<8x256xf32> to vector<8xf32>
    %5 = vector.shape_cast %4 : vector<8xf32> to vector<8x1xf32>
    %cst_4 = arith.constant 3.906250e-03 : f32
    %6 = vector.broadcast %cst_4 : f32 to vector<8x1xf32>
    %7 = arith.mulf %5, %6 : vector<8x1xf32>
    %c0_5 = arith.constant 0 : index
    %c0_6 = arith.constant 0 : index
    %8 = vector.load %arg3[%c0_5, %c0_6] : memref<8x1xf32, #tpu.memory_space<vmem>>, vector<8x1xf32>
    tpu.vector_store %arg3[%c0_5, %c0_6], %7 {strides = array<i32>} : memref<8x1xf32, #tpu.memory_space<vmem>>, vector<8x1xf32>,
    return
  }
  func.func @transform_0(%arg0: i32) -> (i32, i32) {
    %c0_i32 = arith.constant 0 : i32
    %c0_i32_0 = arith.constant 0 : i32
    return %arg0, %c0_i32 : i32, i32
  }
  func.func @transform_1(%arg0: i32) -> (i32, i32) {
    %c0_i32 = arith.constant 0 : i32
    %c0_i32_0 = arith.constant 0 : i32
    return %arg0, %c0_i32 : i32, i32
  }
  func.func @transform_2(%arg0: i32) -> (i32, i32) {
    %c0_i32 = arith.constant 0 : i32
    %c0_i32_0 = arith.constant 0 : i32
    return %arg0, %c0_i32 : i32, i32
  }
}

</mosaic_0001>

<llo_original>
// kernel: tpu_custom_call.1
$region0: #{tpu_custom_call.1}
  #allocation0 [shape = 'u32[]', space=smem, size = 0x4, offset = 0x4, fixed_abs, tag = 'smem constant byte address 0x4 - core index']
  #allocation1 [shape = 'u32[144,128]{1,0:T(1,128)}', space=vmem, size = 0x12000, scoped, tag = 'internal scratch']
  %s0 = inlined_call_operand.hbm [shape: f32[8,256], index: 0, kind: input, shape index: {}]
  %s1 = inlined_call_operand.vmem [shape: f32[8,1], index: 1, kind: output, shape index: {0}]
  %s2 = inlined_call_operand.vmem [shape: f32[8,1], index: 2, kind: output, shape index: {1}]
  %3 = xla_tuple %s1, %s2
  %s4 = sld [smem:[#allocation0]]
  $region26: #{tpu_custom_call.1} parent=0
    _
  %s6 = ssub.s32 1, %s4
  %s7 = scalar_select 0, %s6, %s4
  $region1: #{tpu_custom_call.1} parent=0
    #allocation2 [shape = 'u8[8192]{0}', space=vmem, size = 0x2000, scoped, tag = 'input window, operand 0, single buffered']
    #allocation3 [shape = 's32[1]{0}', space=sflag, size = 0x4, scoped, tag = 'scoped memory for tpu_custom_call.1']
    %8 = vsyncpa [#allocation3], 0
    // Predicated region
    $region2: #{tpu_custom_call.1} parent=1 // pred_check
      _
    $region3: #{tpu_custom_call.1} parent=1 // pred_check_branch
      %10 = sbr.rel (0) target = $region5
    $region4: #{tpu_custom_call.1} parent=1 // pred_region
      %s12 = ssub.s32 256, 256
      %13 = vsyncadd [#allocation3], %s12
      %s15 = sshll.u32 [#allocation2], 4
      %s16 = int_to_ptr.vmem [resolvable:$true] %s15
      %18 = dma.hbm_to_vmem [thread:$0]  %s0, 256, %s16, [#allocation3]
    $region5: #{tpu_custom_call.1} parent=1 // pred_fallthru
      _
    // Predicated region
    $region6: #{tpu_custom_call.1} parent=1 // pred_check
      _
    $region7: #{tpu_custom_call.1} parent=1 // pred_check_branch
      %20 = sbr.rel (0) target = $region9
    $region8: #{tpu_custom_call.1} parent=1 // pred_region
      %21 = dma.done [#allocation3], 256
    $region9: #{tpu_custom_call.1} parent=1 // pred_fallthru
      _
    %v22 = vld [vmem:[#allocation2] sm:$0xff]
    %v23 = vld [vmem:[#allocation2 + $0x8] sm:$0xff]
    %v24 = vmax.f32 %v22, %v23
    %25 = vmax.xlane.f32.xlu0 %v24
    %v26 = vpop.xlane.xlu0 %25
    %vm27 = vcmask 7168
    %28 = vst.msk [vmem:[%s1] sm:$0xff] %vm27, %v26
    %v29 = vadd.f32 %v22, %v23
    %30 = vadd.xlane.f32.xlu0 %v29
    %v31 = vpop.xlane.xlu0 %30
    %v32 = vmul.f32 %v31, 0.00390625
    %33 = vst.msk [vmem:[%s2] sm:$0xff] %vm27, %v32
    // Predicated region
    $region10: #{tpu_custom_call.1} parent=1 // pred_check
      _
    $region11: #{tpu_custom_call.1} parent=1 // pred_check_branch
      %35 = sbr.rel (0) target = $region13
    $region12: #{tpu_custom_call.1} parent=1 // pred_region
      _
    $region13: #{tpu_custom_call.1} parent=1 // pred_fallthru
      _
    // Predicated region
    $region14: #{tpu_custom_call.1} parent=1 // pred_check
      _
    $region15: #{tpu_custom_call.1} parent=1 // pred_check_branch
      %37 = sbr.rel (0) target = $region17
    $region16: #{tpu_custom_call.1} parent=1 // pred_region
      _
    $region17: #{tpu_custom_call.1} parent=1 // pred_fallthru
      _
    // Predicated region
    $region18: #{tpu_custom_call.1} parent=1 // pred_check
      _
    $region19: #{tpu_custom_call.1} parent=1 // pred_check_branch
      %39 = sbr.rel (0) target = $region21
    $region20: #{tpu_custom_call.1} parent=1 // pred_region
      _
    $region21: #{tpu_custom_call.1} parent=1 // pred_fallthru
      _
    // Predicated region
    $region22: #{tpu_custom_call.1} parent=1 // pred_check
      _
    $region23: #{tpu_custom_call.1} parent=1 // pred_check_branch
      %41 = sbr.rel (0) target = $region25
    $region24: #{tpu_custom_call.1} parent=1 // pred_region
      _
    $region25: #{tpu_custom_call.1} parent=1 // pred_fallthru
      _
    %42 = vsyncpa [#allocation3], 1

</llo_original>
